<compile_context>
chip_gen: v6e
topology: v6e:2x2x1
jax: 0.10.0
libtpu: 0.0.40
codegen_flags: <defaults>
</compile_context>

<pallas_src>
import dataclasses
import functools

import jax
import jax.numpy as jnp
import numpy as np
from jax.experimental import pallas as pl
from jax.experimental.pallas import tpu as pltpu


def _round_up(x, m):
    return ((x + m - 1) // m) * m


def _pick_tile(dim, target, multiples=(256, 128)):
    """Largest divisor of `dim` <= target that is a multiple of one of
    `multiples` (tried in preference order); falls back to the full extent."""
    target = min(target, dim)
    for mult in multiples:
        cand = (target // mult) * mult
        while cand > 0:
            if dim % cand == 0:
                return cand
            cand -= mult
    return dim


@dataclasses.dataclass(frozen=True)
class _TpuConfig:
    vmem_budget: int
    tm: int
    tn: int
    tk: int
    tq: int


@functools.lru_cache(maxsize=1)
def _chip_config():
    """Per-generation tile targets + VMEM budget from the real capacity
    (v7x: 64 MiB/TC -> 48 MiB budget; v5e/v6e: 128 MiB -> 96 MiB budget)."""
    vmem_cap = 128 << 20
    kind = ""
    try:
        vmem_cap = int(pltpu.get_tpu_info().vmem_capacity_bytes)
    except Exception:
        pass
    try:
        kind = jax.devices()[0].device_kind.lower()
    except Exception:
        pass
    budget = min(int(vmem_cap) * 3 // 4, 100 << 20)
    if "v5 lite" in kind or "v5e" in kind or "v5lite" in kind:
        # v5e: 128-wide MXU, lower HBM BW, 16 MiB default scoped VMEM.
        return _TpuConfig(budget, 256, 256, 256, 128)
    if vmem_cap <= (64 << 20):
        # v7x-class TensorCore (64 MiB VMEM).
        return _TpuConfig(budget, 256, 512, 1024, 256)
    # v6e / other 128-MiB-VMEM chips.
    return _TpuConfig(budget, 512, 512, 2048, 256)


# ---------------------------------------------------------------------------
# Tiled linear kernel:  y = x @ W^T + b    (F.linear semantics, W is (out, in))
# Grid order (N, M, K): with k innermost and tk ~= K, the weight tile stays
# resident across all M tiles (Pallas skips the DMA when the block index does
# not change between consecutive steps).
# ---------------------------------------------------------------------------
def _linear_kernel(x_ref, w_ref, b_ref, o_ref, acc_ref):
    @pl.when(pl.program_id(2) == 0)
    def _init():
        acc_ref[...] = jnp.zeros_like(acc_ref)

    # Contract x's last dim against w's last dim (W stored as (out, in)):
    # bf16 x bf16 -> f32 accumulation on the MXU, no transposes materialized.
    acc_ref[...] += jax.lax.dot_general(
        x_ref[...], w_ref[...],
        dimension_numbers=(((1,), (1,)), ((), ())),
        preferred_element_type=jnp.float32,
    )

    @pl.when(pl.program_id(2) == pl.num_programs(2) - 1)
    def _finalize():
        y = acc_ref[...] + b_ref[...].astype(jnp.float32)
        o_ref[...] = y.astype(o_ref.dtype)


def pallas_linear(x2d, w, b, out_dtype=None):
    """x2d: (M, K), w: (N, K), b: (1, N) f32 -> (M, N) in out_dtype."""
    M, K = x2d.shape
    N = w.shape[0]
    assert N % 128 == 0 and K % 128 == 0, "n_state must be a multiple of 128"
    out_dtype = out_dtype or x2d.dtype
    cfg = _chip_config()

    # Cast activations once in the wrapper so the MXU sees the weight dtype
    # (bf16 by default) and HBM traffic for x is halved.
    x2d = x2d.astype(w.dtype)

    tn = _pick_tile(N, cfg.tn, (256, 128))
    tk = _pick_tile(K, cfg.tk, (256, 128))
    tm = min(cfg.tm, _round_up(M, 8))
    Mp = _round_up(M, tm)
    xp = x2d if Mp == M else jnp.pad(x2d, ((0, Mp - M), (0, 0)))

    out = pl.pallas_call(
        _linear_kernel,
        out_shape=jax.ShapeDtypeStruct((Mp, N), out_dtype),
        grid_spec=pltpu.PrefetchScalarGridSpec(
            num_scalar_prefetch=0,
            grid=(N // tn, Mp // tm, K // tk),
            in_specs=[
                pl.BlockSpec((tm, tk), lambda j, i, k: (i, k)),   # x
                pl.BlockSpec((tn, tk), lambda j, i, k: (j, k)),   # W (resident over i)
                pl.BlockSpec((1, tn), lambda j, i, k: (0, j)),    # bias
            ],
            out_specs=pl.BlockSpec((tm, tn), lambda j, i, k: (i, j)),
            scratch_shapes=[pltpu.VMEM((tm, tn), jnp.float32)],
        ),
        compiler_params=pltpu.CompilerParams(
            dimension_semantics=("parallel", "parallel", "arbitrary"),
            vmem_limit_bytes=cfg.vmem_budget,
        ),
    )(xp, w, b)
    return out if Mp == M else out[:M]


# ---------------------------------------------------------------------------
# Attention kernel: grid = (B, Tp//tq); q block (1, tq, C), k/v slabs
# (1, Tp, C) all read from the fused (B, Tp, 3C) projection via lane-offset
# BlockSpecs.  Per-head results are stored straight into o_ref (no concat).
# ---------------------------------------------------------------------------
def _mha_kernel(*refs, n_head, head_dim, causal, has_mask, return_qk, valid_len):
    if has_mask:
        q_ref, k_ref, v_ref, m_ref = refs[:4]
        out_refs = refs[4:]
    else:
        q_ref, k_ref, v_ref = refs[:3]
        m_ref = None
        out_refs = refs[3:]
    o_ref = out_refs[0]
    qk_ref = out_refs[1] if return_qk else None

    tq = q_ref.shape[1]
    Tp = k_ref.shape[1]
    qi = pl.program_id(1)

    neg_inf = jnp.float32(float("-inf"))
    mask_add = None
    if causal:
        row = qi * tq + jax.lax.broadcasted_iota(jnp.int32, (tq, Tp), 0)
        col = jax.lax.broadcasted_iota(jnp.int32, (tq, Tp), 1)
        bad = col > row
        if valid_len < Tp:                       # mask padded key columns too
            bad = jnp.logical_or(bad, col >= valid_len)
        mask_add = jnp.where(bad, neg_inf, jnp.float32(0.0))
    elif has_mask:
        mask_add = m_ref[...].astype(jnp.float32)   # already padded in wrapper
    elif valid_len < Tp:
        col = jax.lax.broadcasted_iota(jnp.int32, (tq, Tp), 1)
        mask_add = jnp.where(col >= valid_len, neg_inf, jnp.float32(0.0))

    for h in range(n_head):
        lo = h * head_dim
        hi = lo + head_dim
        q_h = q_ref[0, :, lo:hi]                 # (tq, D) — scale folded in
        k_h = k_ref[0, :, lo:hi]                 # (Tp, D) — scale folded in
        v_h = v_ref[0, :, lo:hi]                 # (Tp, D)

        # (tq, Tp): contract on D without materializing k.T; f32 accumulate.
        qk = jax.lax.dot_general(
            q_h, k_h, dimension_numbers=(((1,), (1,)), ((), ())),
            preferred_element_type=jnp.float32)
        if mask_add is not None:
            qk = qk + mask_add
        if return_qk:
            qk_ref[0, h] = qk.astype(qk_ref.dtype)

        # Softmax in f32 (v5e has no bf16 VPU/EUP); approx reciprocal on EUP.
        # NOTE: like the PyTorch reference, a fully-masked row yields NaN.
        m = jnp.max(qk, axis=-1, keepdims=True)
        e = jnp.exp(qk - m)
        denom = jnp.sum(e, axis=-1, keepdims=True)
        p = (e * pl.reciprocal(denom, approx=True)).astype(v_h.dtype)

        # Store this head's context directly into its lane slice of the output
        # (no outs list / concatenate -> intermediates die here, less spill).
        o_ref[0, :, lo:hi] = jax.lax.dot_general(
            p, v_h, dimension_numbers=(((1,), (0,)), ((), ())),
            preferred_element_type=jnp.float32).astype(o_ref.dtype)


def pallas_attention(qkv, n_head, *, mask=None, causal=False,
                     return_qk=False, qk_dtype=jnp.float32):
    """qkv: (B, T, 3C) fused projection (scale already folded into q/k).
    Returns (wv (B, T, C), qk (B, H, T, T) in qk_dtype or None)."""
    B, T, C3 = qkv.shape
    C = C3 // 3
    D = C // n_head
    assert n_head * D == C and C % 128 == 0, "n_state must be a multiple of 128"
    cfg = _chip_config()
    has_mask = (mask is not None) and not causal
    isz = jnp.dtype(qkv.dtype).itemsize
    qk_isz = jnp.dtype(qk_dtype).itemsize

    def est(tq):
        Tp = _round_up(T, tq)
        e = 2 * tq * C * isz                      # q block (double buffered)
        e += 2 * 2 * Tp * C * isz                 # k + v slabs (double buffered)
        e += 2 * tq * C * isz                     # wv output block
        if has_mask:
            e += 2 * tq * Tp * 4
        if return_qk:
            e += 2 * n_head * tq * Tp * qk_isz    # qk output block
        e += 6 * tq * Tp * 4                      # in-kernel f32 intermediates
        return e

    # Bounded power-of-two q tiles (never the full-T fallback); shrink until
    # the VMEM estimate fits the per-generation budget.
    cands = [c for c in (256, 128, 64, 32, 16, 8) if c <= cfg.tq] or [8]
    tq = next((c for c in cands if c <= max(8, _round_up(T, 8))), cands[-1])
    idx = cands.index(tq)
    while est(tq) > cfg.vmem_budget and idx + 1 < len(cands):
        idx += 1
        tq = cands[idx]
    Tp = _round_up(T, tq)
    nq = Tp // tq

    x_qkv = qkv if Tp == T else jnp.pad(qkv, ((0, 0), (0, Tp - T), (0, 0)))

    in_specs = [
        pl.BlockSpec((1, tq, C), lambda b, qi: (b, qi, 0)),   # q slab
        pl.BlockSpec((1, Tp, C), lambda b, qi: (b, 0, 1)),    # k slab (resident over qi)
        pl.BlockSpec((1, Tp, C), lambda b, qi: (b, 0, 2)),    # v slab (resident over qi)
    ]
    inputs = [x_qkv, x_qkv, x_qkv]
    if has_mask:
        m = mask[:T, :T].astype(jnp.float32)
        if Tp > T:
            m = jnp.pad(m, ((0, Tp - T), (0, Tp - T)))
            m = jnp.where(jnp.arange(Tp)[None, :] >= T,
                          jnp.float32(float("-inf")), m)
        in_specs.append(pl.BlockSpec((tq, Tp), lambda b, qi: (qi, 0)))
        inputs.append(m)

    out_shapes = [jax.ShapeDtypeStruct((B, Tp, C), qkv.dtype)]
    out_specs = [pl.BlockSpec((1, tq, C), lambda b, qi: (b, qi, 0))]
    if return_qk:
        out_shapes.append(jax.ShapeDtypeStruct((B, n_head, Tp, Tp), qk_dtype))
        out_specs.append(
            pl.BlockSpec((1, n_head, tq, Tp), lambda b, qi: (b, 0, qi, 0)))

    kernel = functools.partial(
        _mha_kernel, n_head=n_head, head_dim=D, causal=causal,
        has_mask=has_mask, return_qk=return_qk, valid_len=T)

    result = pl.pallas_call(
        kernel,
        out_shape=tuple(out_shapes),
        grid_spec=pltpu.PrefetchScalarGridSpec(
            num_scalar_prefetch=0,
            grid=(B, nq),
            in_specs=in_specs,
            out_specs=tuple(out_specs),
        ),
        compiler_params=pltpu.CompilerParams(
            dimension_semantics=("parallel", "parallel"),
            vmem_limit_bytes=cfg.vmem_budget,
        ),
    )(*inputs)

    wv = result[0]
    qk = result[1] if return_qk else None
    if Tp != T:
        wv = wv[:, :T, :]
        if qk is not None:
            qk = qk[:, :, :T, :T]
    return wv, qk


# ---------------------------------------------------------------------------
# MultiHeadAttention forward (self-attention path)
# ---------------------------------------------------------------------------
class MultiHeadAttentionPallas:
    def __init__(self, n_state: int, n_head: int, key, dtype=jnp.float32,
                 compute_dtype=jnp.bfloat16):
        assert n_state % n_head == 0
        self.n_state = n_state
        self.n_head = n_head
        self.compute_dtype = compute_dtype
        D = n_state // n_head
        scale = float(D) ** (-0.25)

        ks = jax.random.split(key, 7)
        s = 1.0 / float(np.sqrt(n_state))
        uni = lambda kk, shape: jax.random.uniform(kk, shape, dtype, -s, s)
        # nn.Linear layout: weight is (out, in); key projection has no bias.
        self.wq = uni(ks[0], (n_state, n_state))
        self.bq = uni(ks[1], (n_state,))
        self.wk = uni(ks[2], (n_state, n_state))
        self.wv = uni(ks[3], (n_state, n_state))
        self.bv = uni(ks[4], (n_state,))
        self.wo = uni(ks[5], (n_state, n_state))
        self.bo = uni(ks[6], (n_state,))

        # Fused QKV weights, D**-0.25 scale folded into Q/K, stored in the MXU
        # compute dtype (bf16 by default: ~4x matmul throughput, half the HBM
        # traffic).  Biases stay f32 (added on the f32 accumulator).
        self.w_qkv = jnp.concatenate(
            [self.wq * scale, self.wk * scale, self.wv], axis=0
        ).astype(compute_dtype)                                        # (3C, C)
        self.b_qkv = jnp.concatenate(
            [self.bq * scale, jnp.zeros((n_state,), dtype), self.bv]
        )[None, :].astype(jnp.float32)
        self.w_out = self.wo.astype(compute_dtype)
        self.b_out = self.bo[None, :].astype(jnp.float32)

    def __call__(self, x, mask=None, causal=False, return_qk=False):
        # return_qk defaults to False (inference fast path: no (B,H,T,T)
        # writeback); pass return_qk=True for the PyTorch (out, qk) contract.
        B, T, C = x.shape
        qkv = pallas_linear(x.reshape(B * T, C), self.w_qkv, self.b_qkv,
                            out_dtype=self.compute_dtype)
        qkv = qkv.reshape(B, T, 3 * C)
        wv, qk = pallas_attention(qkv, self.n_head, mask=mask, causal=causal,
                                  return_qk=return_qk)
        out = pallas_linear(wv.reshape(B * T, C), self.w_out, self.b_out,
                            out_dtype=x.dtype)
        return out.reshape(B, T, C), qk


if __name__ == "__main__":
    key = jax.random.PRNGKey(0)
    k_x, k_p = jax.random.split(key)

    # Small Whisper-like shapes: head_dim = 64, lane-dense n_state (mult of 128).
    # T=12 deliberately exercises the sequence-padding + key-mask path.
    B, T, n_state, n_head = 2, 12, 256, 4
    x = jax.random.normal(k_x, (B, T, n_state), jnp.float32)

    mha = MultiHeadAttentionPallas(n_state, n_head, k_p)   # bf16 compute default

    # Inference fast path (no qk writeback).
    out_fast, qk_none = mha(x, causal=True)
    jax.block_until_ready(out_fast)
    assert qk_none is None

    # Full-semantics path (matches the PyTorch module's (out, qk) contract).
    out, qk = mha(x, causal=True, return_qk=True)
    jax.block_until_ready((out, qk))

    # ---- pure-jnp f32 reference mirroring the PyTorch module ----
    D = n_state // n_head
    scale = float(D) ** (-0.25)
    cmask = jnp.triu(jnp.full((T, T), float("-inf"), jnp.float32), k=1)

    q_r = x @ mha.wq.T + mha.bq
    k_r = x @ mha.wk.T
    v_r = x @ mha.wv.T + mha.bv
    qh = q_r.reshape(B, T, n_head, D).transpose(0, 2, 1, 3) * scale
    kh = k_r.reshape(B, T, n_head, D).transpose(0, 2, 3, 1) * scale
    vh = v_r.reshape(B, T, n_head, D).transpose(0, 2, 1, 3)
    qk_ref = (qh @ kh + cmask).astype(jnp.float32)
    w_ref = jax.nn.softmax(qk_ref, axis=-1)
    wv_ref = (w_ref @ vh).transpose(0, 2, 1, 3).reshape(B, T, n_state)
    out_ref = wv_ref @ mha.wo.T + mha.bo

    assert out.shape == (B, T, n_state)
    assert qk.shape == (B, n_head, T, T) and qk.dtype == jnp.float32
    # bf16 MXU path vs f32 reference: loose tolerances.
    np.testing.assert_allclose(np.asarray(qk), np.asarray(qk_ref),
                               rtol=3e-2, atol=3e-2)
    np.testing.assert_allclose(np.asarray(out), np.asarray(out_ref),
                               rtol=3e-2, atol=3e-2)
    # Fast path and qk path share the same math.
    np.testing.assert_allclose(np.asarray(out_fast), np.asarray(out),
                               rtol=0, atol=1e-4)

    # Explicit dense-mask path must match the in-kernel causal path.
    out2, _ = mha(x, mask=cmask)
    jax.block_until_ready(out2)
    np.testing.assert_allclose(np.asarray(out2), np.asarray(out),
                               rtol=0, atol=1e-4)

    print("KERNEL_OK")
</pallas_src>

<mosaic_0001>
module attributes {stable_mosaic.version = 11 : i64} {
  func.func @_linear_kernel(%arg0: i32, %arg1: i32, %arg2: i32, %arg3: memref<24x256xbf16, #tpu.memory_space<vmem>>, %arg4: memref<256x256xbf16, #tpu.memory_space<vmem>>, %arg5: memref<1x256xf32, #tpu.memory_space<vmem>>, %arg6: memref<24x256xbf16, #tpu.memory_space<vmem>>, %arg7: memref<24x256xf32, #tpu.memory_space<vmem>>) attributes {dimension_semantics = [#tpu.dimension_semantics<parallel>, #tpu.dimension_semantics<parallel>, #tpu.dimension_semantics<arbitrary>], iteration_bounds = array<i64: 3, 1, 1>, scalar_prefetch = 0 : i64, scratch_operands = 1 : i64, tpu.core_type = #tpu.core_type<tc>, window_params = [{transform_indices = @transform_0, window_bounds = array<i64: 24, 256>}, {transform_indices = @transform_1, window_bounds = array<i64: 256, 256>}, {transform_indices = @transform_2, window_bounds = array<i64: 1, 256>}, {transform_indices = @transform_3, window_bounds = array<i64: 24, 256>}]} {
    %c0_i32 = arith.constant 0 : i32
    %0 = arith.cmpi eq, %arg2, %c0_i32 : i32
    %1 = arith.extui %0 : i1 to i32
    %c0_i32_0 = arith.constant 0 : i32
    %2 = arith.cmpi ne, %1, %c0_i32_0 : i32
    scf.if %2 {
      %cst_10 = arith.constant 0.000000e+00 : f32
      %12 = vector.broadcast %cst_10 : f32 to vector<24x256xf32>
      %c0_11 = arith.constant 0 : index
      %c0_12 = arith.constant 0 : index
      %13 = vector.load %arg7[%c0_11, %c0_12] : memref<24x256xf32, #tpu.memory_space<vmem>>, vector<24x256xf32>
      tpu.vector_store %arg7[%c0_11, %c0_12], %12 {strides = array<i32>} : memref<24x256xf32, #tpu.memory_space<vmem>>, vector<24x256xf32>,
    } else {
    }
    %c0 = arith.constant 0 : index
    %c0_1 = arith.constant 0 : index
    %3 = vector.load %arg7[%c0, %c0_1] : memref<24x256xf32, #tpu.memory_space<vmem>>, vector<24x256xf32>
    %c0_2 = arith.constant 0 : index
    %c0_3 = arith.constant 0 : index
    %4 = vector.load %arg3[%c0_2, %c0_3] : memref<24x256xbf16, #tpu.memory_space<vmem>>, vector<24x256xbf16>
    %c0_4 = arith.constant 0 : index
    %c0_5 = arith.constant 0 : index
    %5 = vector.load %arg4[%c0_4, %c0_5] : memref<256x256xbf16, #tpu.memory_space<vmem>>, vector<256x256xbf16>
    %cst = arith.constant dense<0.000000e+00> : vector<24x256xf32>
    %6 = tpu.matmul %4, %5, %cst {dimension_numbers = #tpu.dot_dimension_numbers<[1], [1], [0], [0], [0, 0, 1, 0], [], []>} : vector<24x256xbf16>, vector<256x256xbf16>, vector<24x256xf32> -> vector<24x256xf32>
    %7 = arith.addf %3, %6 : vector<24x256xf32>
    %c0_6 = arith.constant 0 : index
    %c0_7 = arith.constant 0 : index
    %8 = vector.load %arg7[%c0_6, %c0_7] : memref<24x256xf32, #tpu.memory_space<vmem>>, vector<24x256xf32>
    tpu.vector_store %arg7[%c0_6, %c0_7], %7 {strides = array<i32>} : memref<24x256xf32, #tpu.memory_space<vmem>>, vector<24x256xf32>,
    %c0_i32_8 = arith.constant 0 : i32
    %9 = arith.cmpi eq, %arg2, %c0_i32_8 : i32
    %10 = arith.extui %9 : i1 to i32
    %c0_i32_9 = arith.constant 0 : i32
    %11 = arith.cmpi ne, %10, %c0_i32_9 : i32
    scf.if %11 {
      %c0_10 = arith.constant 0 : index
      %c0_11 = arith.constant 0 : index
      %12 = vector.load %arg7[%c0_10, %c0_11] : memref<24x256xf32, #tpu.memory_space<vmem>>, vector<24x256xf32>
      %c0_12 = arith.constant 0 : index
      %c0_13 = arith.constant 0 : index
      %13 = vector.load %arg5[%c0_12, %c0_13] : memref<1x256xf32, #tpu.memory_space<vmem>>, vector<1x256xf32>
      %14 = vector.broadcast %13 : vector<1x256xf32> to vector<24x256xf32>
      %15 = arith.addf %12, %14 : vector<24x256xf32>
      %16 = arith.truncf %15 : vector<24x256xf32> to vector<24x256xbf16>
      %c0_14 = arith.constant 0 : index
      %c0_15 = arith.constant 0 : index
      %17 = vector.load %arg6[%c0_14, %c0_15] : memref<24x256xbf16, #tpu.memory_space<vmem>>, vector<24x256xbf16>
      tpu.vector_store %arg6[%c0_14, %c0_15], %16 {strides = array<i32>} : memref<24x256xbf16, #tpu.memory_space<vmem>>, vector<24x256xbf16>,
    } else {
    }
    return
  }
  func.func @transform_0(%arg0: i32, %arg1: i32, %arg2: i32) -> (i32, i32) {
    %c0_i32 = arith.constant 0 : i32
    return %arg1, %arg2 : i32, i32
  }
  func.func @transform_1(%arg0: i32, %arg1: i32, %arg2: i32) -> (i32, i32) {
    %c0_i32 = arith.constant 0 : i32
    return %arg0, %arg2 : i32, i32
  }
  func.func @transform_2(%arg0: i32, %arg1: i32, %arg2: i32) -> (i32, i32) {
    %c0_i32 = arith.constant 0 : i32
    %c0_i32_0 = arith.constant 0 : i32
    return %c0_i32, %arg0 : i32, i32
  }
  func.func @transform_3(%arg0: i32, %arg1: i32, %arg2: i32) -> (i32, i32) {
    %c0_i32 = arith.constant 0 : i32
    return %arg1, %arg0 : i32, i32
  }
}

</mosaic_0001>

<llo_original>
// kernel: tpu_custom_call.1
$region0: #{tpu_custom_call.1}
  #allocation0 [shape = 'u32[]', space=smem, size = 0x4, offset = 0x4, fixed_abs, tag = 'smem constant byte address 0x4 - core index']
  #allocation1 [shape = 'u32[144,128]{1,0:T(1,128)}', space=vmem, size = 0x12000, scoped, tag = 'internal scratch']
  #allocation2 [shape = 'f32[24,256]{1,0:T(8,128)}', space=vmem, size = 0x6000, scoped, tag = 'scratch operand']
  %s0 = inlined_call_operand.hbm [shape: bf16[24,256], index: 0, kind: input, shape index: {}]
  %s1 = inlined_call_operand.hbm [shape: bf16[768,256], index: 1, kind: input, shape index: {}]
  %s2 = inlined_call_operand.hbm [shape: f32[1,768], index: 2, kind: input, shape index: {}]
  %s3 = inlined_call_operand.hbm [shape: bf16[24,768], index: 3, kind: output, shape index: {}]
  %s4 = sld [smem:[#allocation0]]
  $region65: #{tpu_custom_call.1} parent=0
    _
  %s6 = ssub.s32 1, %s4
  %s7 = scalar_select 0, %s6, %s4
  $region1: #{tpu_custom_call.1} parent=0
    #allocation3 [shape = 'u8[12288]{0}', space=vmem, size = 0x3000, scoped, tag = 'input window, operand 0, single buffered']
    #allocation4 [shape = 's32[2]{0}', space=sflag, size = 0x8, scoped, tag = 'scoped memory for tpu_custom_call.1']
    #allocation5 [shape = 's32[2]{0}', space=sflag, size = 0x8, scoped, tag = 'scoped memory for tpu_custom_call.1']
    #allocation6 [shape = 'u8[262144]{0}', space=vmem, size = 0x40000, scoped, tag = 'input window, operand 1']
    #allocation7 [shape = 's32[2]{0}', space=sflag, size = 0x8, scoped, tag = 'scoped memory for tpu_custom_call.1']
    #allocation8 [shape = 'u8[2048]{0}', space=vmem, size = 0x800, scoped, tag = 'input window, operand 2']
    #allocation9 [shape = 'u8[24576]{0}', space=vmem, size = 0x6000, scoped, tag = 'output window, operand 0']
    %8 = vsyncpa [#allocation4], 0
    %9 = vsyncpa [#allocation7], 0
    %s10 = scalar_lea.sflag [#allocation7], 1
    %11 = vsyncpa %s10, 0
    %12 = vsyncpa [#allocation5], 0
    %s13 = scalar_lea.sflag [#allocation5], 1
    %14 = vsyncpa %s13, 0
    loop: start=0, step=1, limit=5
    $region2: #{tpu_custom_call.1} parent=1 // loop_pre_header
      _
    $region3: #{tpu_custom_call.1} parent=1 // loop_header
      %s16 = sphi 0, %s20
      %p17 = scmp.ge.s32.totalorder %s16, 5
      %s23 = sphi 0, %s42
      %s24 = sphi 0, %s38
      %s25 = sphi 0, %s34
      %s26 = sphi 0, %s23
      %s27 = sphi 0, %s24
      %s28 = sphi 0, %s25
      %s29 = sphi 0, %s26
      %s30 = sphi 0, %s27
      %s31 = sphi 0, %s28
      %s47 = sphi 0, %s49
      %s50 = sphi 0, %s47
      %s51 = sphi 0, %s50
      %s67 = sphi 0, %s51
      %s75 = sphi 0, %s77
      %s78 = sphi 0, %s75
      %s79 = sphi 0, %s78
      %s95 = sphi 0, %s79
      %s101 = sphi 0, %s103
      %s104 = sphi 0, %s101
      %s105 = sphi 0, %s104
      %s121 = sphi 0, %s105
      %s129 = sphi 0, %s131
      %s132 = sphi 0, %s129
      %s133 = sphi 0, %s132
      %s149 = sphi 0, %s133
    $region4: #{tpu_custom_call.1} parent=1 // loop_header_branch
      %19 = sbr.rel (%p17) target = $region8
    $region5: #{tpu_custom_call.1} parent=1 // loop_body
      %s21 = ssub.s32 %s16, 1
      %s22 = ssub.s32 %s16, 2
      %s32 = sadd.s32 1, %s25
      %p33 = scmp.ge.s32.totalorder %s32, 1
      %s34 = scalar_select %p33, 0, %s32
      %s35 = sadd.s32 1, %s24
      %s36 = scalar_select %p33, %s35, %s24
      %p37 = scmp.ge.s32.totalorder %s36, 1
      %s38 = scalar_select %p37, 0, %s36
      %s39 = sadd.s32 1, %s23
      %s40 = scalar_select %p37, %s39, %s23
      %p41 = scmp.ge.s32.totalorder %s40, 3
      %s42 = scalar_select %p41, 0, %s40
      %s43 = ssub.s32 %s24, %s38
      %s44 = ssub.s32 %s25, %s34
      %s45 = sor.u32 %s43, %s44
      %p46 = scmp.eq.s32.totalorder %s45, 0
      %s48 = sadd.s32 %s47, 1
      %s49 = scalar_select %p46, %s47, %s48
      %p52 = pneg %p46
      %p53 = scmp.eq.s32.totalorder %s16, 2
      %p54 = por %p52, %p53
      %p55 = scmp.ne.s32.totalorder %s47, %s50
      %p56 = scmp.eq.s32.totalorder %s16, 0
      %p57 = por %p55, %p56
      %p58 = scmp.ne.s32.totalorder %s47, %s50
      %p59 = scmp.eq.s32.totalorder %s21, 2
      %p60 = por %p58, %p59
      %p61 = scmp.ne.s32.totalorder %s50, %s51
      %p62 = scmp.eq.s32.totalorder %s21, 0
      %p63 = por %p61, %p62
      %p64 = scmp.ne.s32.totalorder %s50, %s51
      %p65 = scmp.eq.s32.totalorder %s22, 2
      %p66 = por %p64, %p65
      %p68 = scmp.ne.s32.totalorder %s51, %s67
      %p69 = scmp.eq.s32.totalorder %s22, 0
      %p70 = por %p68, %p69
      %s71 = ssub.s32 %s23, %s42
      %s72 = ssub.s32 %s25, %s34
      %s73 = sor.u32 %s71, %s72
      %p74 = scmp.eq.s32.totalorder %s73, 0
      %s76 = sadd.s32 %s75, 1
      %s77 = scalar_select %p74, %s75, %s76
      %p80 = pneg %p74
      %p81 = scmp.eq.s32.totalorder %s16, 2
      %p82 = por %p80, %p81
      %p83 = scmp.ne.s32.totalorder %s75, %s78
      %p84 = scmp.eq.s32.totalorder %s16, 0
      %p85 = por %p83, %p84
      %p86 = scmp.ne.s32.totalorder %s75, %s78
      %p87 = scmp.eq.s32.totalorder %s21, 2
      %p88 = por %p86, %p87
      %p89 = scmp.ne.s32.totalorder %s78, %s79
      %p90 = scmp.eq.s32.totalorder %s21, 0
      %p91 = por %p89, %p90
      %p92 = scmp.ne.s32.totalorder %s78, %s79
      %p93 = scmp.eq.s32.totalorder %s22, 2
      %p94 = por %p92, %p93
      %p96 = scmp.ne.s32.totalorder %s79, %s95
      %p97 = scmp.eq.s32.totalorder %s22, 0
      %p98 = por %p96, %p97
      %s99 = ssub.s32 %s23, %s42
      %p100 = scmp.eq.s32.totalorder %s99, 0
      %s102 = sadd.s32 %s101, 1
      %s103 = scalar_select %p100, %s101, %s102
      %p106 = pneg %p100
      %p107 = scmp.eq.s32.totalorder %s16, 2
      %p108 = por %p106, %p107
      %p109 = scmp.ne.s32.totalorder %s101, %s104
      %p110 = scmp.eq.s32.totalorder %s16, 0
      %p111 = por %p109, %p110
      %p112 = scmp.ne.s32.totalorder %s101, %s104
      %p113 = scmp.eq.s32.totalorder %s21, 2
      %p114 = por %p112, %p113
      %p115 = scmp.ne.s32.totalorder %s104, %s105
      %p116 = scmp.eq.s32.totalorder %s21, 0
      %p117 = por %p115, %p116
      %p118 = scmp.ne.s32.totalorder %s104, %s105
      %p119 = scmp.eq.s32.totalorder %s22, 2
      %p120 = por %p118, %p119
      %p122 = scmp.ne.s32.totalorder %s105, %s121
      %p123 = scmp.eq.s32.totalorder %s22, 0
      %p124 = por %p122, %p123
      %s125 = ssub.s32 %s24, %s38
      %s126 = ssub.s32 %s23, %s42
      %s127 = sor.u32 %s125, %s126
      %p128 = scmp.eq.s32.totalorder %s127, 0
      %s130 = sadd.s32 %s129, 1
      %s131 = scalar_select %p128, %s129, %s130
      %p134 = pneg %p128
      %p135 = scmp.eq.s32.totalorder %s16, 2
      %p136 = por %p134, %p135
      %p137 = scmp.ne.s32.totalorder %s129, %s132
      %p138 = scmp.eq.s32.totalorder %s16, 0
      %p139 = por %p137, %p138
      %p140 = scmp.ne.s32.totalorder %s129, %s132
      %p141 = scmp.eq.s32.totalorder %s21, 2
      %p142 = por %p140, %p141
      %p143 = scmp.ne.s32.totalorder %s132, %s133
      %p144 = scmp.eq.s32.totalorder %s21, 0
      %p145 = por %p143, %p144
      %p146 = scmp.ne.s32.totalorder %s132, %s133
      %p147 = scmp.eq.s32.totalorder %s22, 2
      %p148 = por %p146, %p147
      %p150 = scmp.ne.s32.totalorder %s133, %s149
      %p151 = scmp.eq.s32.totalorder %s22, 0
      %p152 = por %p150, %p151
      %p153 = scmp.le.s32.totalorder 1, %s16
      %p154 = scmp.lt.s32.totalorder %s16, 4
      %p155 = pnand %p153, %p154
      %p156 = pneg %p155
      // Predicated region
      $region9: #{tpu_custom_call.1} parent=5 // pred_check
        _
      $region10: #{tpu_custom_call.1} parent=5 // pred_check_branch
        %158 = sbr.rel (%p155) target = $region12
      $region11: #{tpu_custom_call.1} parent=5 // pred_region
        %s159 = ssub.s32 %s16, 1
        // Predicated region
        $region13: #{tpu_custom_call.1} parent=11 // pred_check
          %p160 = pneg %p63
        $region14: #{tpu_custom_call.1} parent=11 // pred_check_branch
          %162 = sbr.rel (%p160) target = $region16
        $region15: #{tpu_custom_call.1} parent=11 // pred_region
          %s163 = smul.u32 3, %s27
          %s164 = smul.u32 2, %s28
          %s166 = ssub.s32 384, 384
          %167 = vsyncadd [#allocation4], %s166
          %s168 = smul.addr %s163, 2
          %s169 = sadd.s32 %s164, %s168
          %s170 = smul.addr %s169, 64
          %s171 = scalar_lea.hbm %s0, %s170
          %s172 = sshll.u32 [#allocation3], 4
          %s173 = int_to_ptr.vmem [resolvable:$true] %s172
          %178 = dma.hbm_to_vmem [thread:$0]  %s171, 384, %s173, [#allocation4], 128, 128, 8
        $region16: #{tpu_custom_call.1} parent=11 // pred_fallthru
          _
      $region12: #{tpu_custom_call.1} parent=5 // pred_fallthru
        _
      %p179 = scmp.lt.s32.totalorder %s16, 3
      // Predicated region
      $region17: #{tpu_custom_call.1} parent=5 // pred_check
        %p180 = pneg %p179
      $region18: #{tpu_custom_call.1} parent=5 // pred_check_branch
        %182 = sbr.rel (%p180) target = $region20
      $region19: #{tpu_custom_call.1} parent=5 // pred_region
        // Predicated region
        $region21: #{tpu_custom_call.1} parent=19 // pred_check
          %p183 = pneg %p85
        $region22: #{tpu_custom_call.1} parent=19 // pred_check_branch
          %185 = sbr.rel (%p183) target = $region24
        $region23: #{tpu_custom_call.1} parent=19 // pred_region
          %s186 = sand.u32 %s16, 1
          %s187 = scalar_lea.sflag [#allocation7], %s186
          %s188 = sand.u32 %s75, 1
          %s189 = smul.addr %s188, 256
          %s190 = scalar_lea.vmem [#allocation6], %s189
          %s191 = smul.u32 32, %s23
          %s192 = smul.u32 2, %s25
          %s194 = ssub.s32 4096, 4096
          %195 = vsyncadd %s187, %s194
          %s196 = smul.addr %s191, 2
          %s197 = sadd.s32 %s192, %s196
          %s198 = smul.addr %s197, 64
          %s199 = scalar_lea.hbm %s1, %s198
          %s200 = sshll.u32 %s190, 4
          %s201 = int_to_ptr.vmem [resolvable:$true] %s200
          %206 = dma.hbm_to_vmem [thread:$0]  %s199, 4096, %s201, %s187, 128, 128, 8
        $region24: #{tpu_custom_call.1} parent=19 // pred_fallthru
          _
        // Predicated region
        $region25: #{tpu_custom_call.1} parent=19 // pred_check
          %p207 = pneg %p111
        $region26: #{tpu_custom_call.1} parent=19 // pred_check_branch
          %209 = sbr.rel (%p207) target = $region28
        $region27: #{tpu_custom_call.1} parent=19 // pred_region
          %s210 = sand.u32 %s16, 1
          %s211 = scalar_lea.sflag [#allocation7], %s210
          %s212 = sand.u32 %s101, 1
          %s213 = smul.addr %s212, 2
          %s214 = scalar_lea.vmem [#allocation8], %s213
          %s215 = smul.u32 2, %s23
          %s217 = ssub.s32 32, 32
          %218 = vsyncadd %s211, %s217
          %s219 = smul.addr %s215, 16
          %s220 = scalar_lea.hbm %s2, %s219
          %s222 = sshll.u32 %s214, 4
          %s223 = int_to_ptr.vmem [resolvable:$true] %s222
          %225 = dma.hbm_to_vmem [thread:$0]  %s220, 32, %s223, %s211
        $region28: #{tpu_custom_call.1} parent=19 // pred_fallthru
          _
      $region20: #{tpu_custom_call.1} parent=5 // pred_fallthru
        _
      %p226 = scmp.le.s32.totalorder 1, %s16
      %p227 = scmp.lt.s32.totalorder %s16, 4
      %p228 = pnand %p226, %p227
      %p229 = pneg %p228
      // Predicated region
      $region29: #{tpu_custom_call.1} parent=5 // pred_check
        _
      $region30: #{tpu_custom_call.1} parent=5 // pred_check_branch
        %231 = sbr.rel (%p228) target = $region32
      $region31: #{tpu_custom_call.1} parent=5 // pred_region
        %s232 = ssub.s32 %s16, 1
        // Predicated region
        $region33: #{tpu_custom_call.1} parent=31 // pred_check
          %p233 = pneg %p63
        $region34: #{tpu_custom_call.1} parent=31 // pred_check_branch
          %235 = sbr.rel (%p233) target = $region36
        $region35: #{tpu_custom_call.1} parent=31 // pred_region
          %236 = dma.done [#allocation4], 384
        $region36: #{tpu_custom_call.1} parent=31 // pred_fallthru
          _
        %s237 = sand.u32 %s21, 1
        %s238 = scalar_lea.sflag [#allocation7], %s237
        %s239 = sand.u32 %s78, 1
        %s240 = smul.addr %s239, 256
        %s241 = scalar_lea.vmem [#allocation6], %s240
        // Predicated region
        $region37: #{tpu_custom_call.1} parent=31 // pred_check
          %p242 = pneg %p91
        $region38: #{tpu_custom_call.1} parent=31 // pred_check_branch
          %244 = sbr.rel (%p242) target = $region40
        $region39: #{tpu_custom_call.1} parent=31 // pred_region
          %245 = dma.done %s238, 4096
        $region40: #{tpu_custom_call.1} parent=31 // pred_fallthru
          _
        %s246 = sand.u32 %s21, 1
        %s247 = scalar_lea.sflag [#allocation7], %s246
        %s248 = sand.u32 %s104, 1
        %s249 = smul.addr %s248, 2
        %s250 = scalar_lea.vmem [#allocation8], %s249
        // Predicated region
        $region41: #{tpu_custom_call.1} parent=31 // pred_check
          %p251 = pneg %p117
        $region42: #{tpu_custom_call.1} parent=31 // pred_check_branch
          %253 = sbr.rel (%p251) target = $region44
        $region43: #{tpu_custom_call.1} parent=31 // pred_region
          %254 = dma.done %s247, 32
        $region44: #{tpu_custom_call.1} parent=31 // pred_fallthru
          _
        %p255 = pneg %p63
        %p256 = pneg %p60
        %s257 = sand.u32 %s21, 1
        %s258 = scalar_lea.sflag [#allocation7], %s257
        %s259 = sand.u32 %s78, 1
        %s260 = smul.addr %s259, 256
        %s261 = scalar_lea.vmem [#allocation6], %s260
        %p262 = pneg %p91
        %p263 = pneg %p88
        %s264 = sand.u32 %s21, 1
        %s265 = scalar_lea.sflag [#allocation7], %s264
        %s266 = sand.u32 %s104, 1
        %s267 = smul.addr %s266, 2
        %s268 = scalar_lea.vmem [#allocation8], %s267
        %p269 = pneg %p117
        %p270 = pneg %p114
        %p271 = pneg %p145
        %p272 = pneg %p142
        %s273 = sand.u32 %s132, 1
        %s274 = scalar_lea.sflag [#allocation5], %s273
        %s275 = sand.u32 %s132, 1
        %s276 = smul.addr %s275, 24
        %s277 = scalar_lea.vmem [#allocation9], %s276
        %s278 = smul.u32 3, %s27
        %s279 = smul.u32 2, %s28
        %s280 = smul.u32 32, %s26
        %s281 = smul.u32 2, %s28
        %s282 = smul.u32 2, %s26
        %s283 = smul.u32 3, %s27
        %s284 = smul.u32 2, %s26
        %p285 = scmp.eq.s32.totalorder %s28, 0
        // Predicated region
        $region45: #{tpu_custom_call.1} parent=31 // pred_check
          %p286 = pneg %p285
        $region46: #{tpu_custom_call.1} parent=31 // pred_check_branch
          %288 = sbr.rel (%p286) target = $region48
        $region47: #{tpu_custom_call.1} parent=31 // pred_region
          %289 = vst [vmem:[#allocation2] sm:$0xff] 0.0
          %290 = vst [vmem:[#allocation2 + $0x8] sm:$0xff] 0.0
          %291 = vst [vmem:[#allocation2 + $0x10] sm:$0xff] 0.0
          %292 = vst [vmem:[#allocation2 + $0x18] sm:$0xff] 0.0
          %293 = vst [vmem:[#allocation2 + $0x20] sm:$0xff] 0.0
          %294 = vst [vmem:[#allocation2 + $0x28] sm:$0xff] 0.0
        $region48: #{tpu_custom_call.1} parent=31 // pred_fallthru
          _
        %v295 = vld [vmem:[#allocation2] sm:$0xff]
        %v296 = vld [vmem:[#allocation2 + $0x8] sm:$0xff]
        %v297 = vld [vmem:[#allocation2 + $0x10] sm:$0xff]
        %v298 = vld [vmem:[#allocation2 + $0x18] sm:$0xff]
        %v299 = vld [vmem:[#allocation2 + $0x20] sm:$0xff]
        %v300 = vld [vmem:[#allocation2 + $0x28] sm:$0xff]
        %v301 = vld [vmem:[#allocation3] sm:$0xff]
        %v302 = vld [vmem:[#allocation3 + $0x8] sm:$0xff]
        %v303 = vld [vmem:[#allocation3 + $0x10] sm:$0xff]
        %v304 = vld [vmem:[%s241] sm:$0xff]
        %v305 = vld [vmem:[%s241 + $0x8] sm:$0xff]
        %v306 = vld [vmem:[%s241 + $0x10] sm:$0xff]
        %v307 = vld [vmem:[%s241 + $0x18] sm:$0xff]
        %v308 = vld [vmem:[%s241 + $0x20] sm:$0xff]
        %v309 = vld [vmem:[%s241 + $0x28] sm:$0xff]
        %v310 = vld [vmem:[%s241 + $0x30] sm:$0xff]
        %v311 = vld [vmem:[%s241 + $0x38] sm:$0xff]
        %v312 = vld [vmem:[%s241 + $0x40] sm:$0xff]
        %v313 = vld [vmem:[%s241 + $0x48] sm:$0xff]
        %v314 = vld [vmem:[%s241 + $0x50] sm:$0xff]
        %v315 = vld [vmem:[%s241 + $0x58] sm:$0xff]
        %v316 = vld [vmem:[%s241 + $0x60] sm:$0xff]
        %v317 = vld [vmem:[%s241 + $0x68] sm:$0xff]
        %v318 = vld [vmem:[%s241 + $0x70] sm:$0xff]
        %v319 = vld [vmem:[%s241 + $0x78] sm:$0xff]
        %v320 = vld [vmem:[%s241 + $0x80] sm:$0xff]
        %v321 = vld [vmem:[%s241 + $0x88] sm:$0xff]
        %v322 = vld [vmem:[%s241 + $0x90] sm:$0xff]
        %v323 = vld [vmem:[%s241 + $0x98] sm:$0xff]
        %v324 = vld [vmem:[%s241 + $0xa0] sm:$0xff]
        %v325 = vld [vmem:[%s241 + $0xa8] sm:$0xff]
        %v326 = vld [vmem:[%s241 + $0xb0] sm:$0xff]
        %v327 = vld [vmem:[%s241 + $0xb8] sm:$0xff]
        %v328 = vld [vmem:[%s241 + $0xc0] sm:$0xff]
        %v329 = vld [vmem:[%s241 + $0xc8] sm:$0xff]
        %v330 = vld [vmem:[%s241 + $0xd0] sm:$0xff]
        %v331 = vld [vmem:[%s241 + $0xd8] sm:$0xff]
        %v332 = vld [vmem:[%s241 + $0xe0] sm:$0xff]
        %v333 = vld [vmem:[%s241 + $0xe8] sm:$0xff]
        %v334 = vld [vmem:[%s241 + $0xf0] sm:$0xff]
        %v335 = vld [vmem:[%s241 + $0xf8] sm:$0xff]
        %v339 = vunpack.c.l.b16 %v301
        %v340 = vunpack.c.h.b16 %v301
        %v341 = vunpack.c.l.b16 %v302
        %v342 = vunpack.c.h.b16 %v302
        %v343 = vunpack.c.l.b16 %v303
        %v344 = vunpack.c.h.b16 %v303
        %v345 = vpack.c.b16 %v341, %v339
        %v346 = vpack.c.b16 %v342, %v340
        %v347 = vpack.c.b16 %v343, %v343
        %v348 = vpack.c.b16 %v344, %v344
        %v385 = vunpack.c.l.b16 %v304
        %v386 = vunpack.c.h.b16 %v304
        %v387 = vunpack.c.l.b16 %v305
        %v388 = vunpack.c.h.b16 %v305
        %v389 = vunpack.c.l.b16 %v306
        %v390 = vunpack.c.h.b16 %v306
        %v391 = vunpack.c.l.b16 %v307
        %v392 = vunpack.c.h.b16 %v307
        %v393 = vunpack.c.l.b16 %v308
        %v394 = vunpack.c.h.b16 %v308
        %v395 = vunpack.c.l.b16 %v309
        %v396 = vunpack.c.h.b16 %v309
        %v397 = vunpack.c.l.b16 %v310
        %v398 = vunpack.c.h.b16 %v310
        %v399 = vunpack.c.l.b16 %v311
        %v400 = vunpack.c.h.b16 %v311
        %v401 = vunpack.c.l.b16 %v312
        %v402 = vunpack.c.h.b16 %v312
        %v403 = vunpack.c.l.b16 %v313
        %v404 = vunpack.c.h.b16 %v313
        %v405 = vunpack.c.l.b16 %v314
        %v406 = vunpack.c.h.b16 %v314
        %v407 = vunpack.c.l.b16 %v315
        %v408 = vunpack.c.h.b16 %v315
        %v409 = vunpack.c.l.b16 %v316
        %v410 = vunpack.c.h.b16 %v316
        %v411 = vunpack.c.l.b16 %v317
        %v412 = vunpack.c.h.b16 %v317
        %v413 = vunpack.c.l.b16 %v318
        %v414 = vunpack.c.h.b16 %v318
        %v415 = vunpack.c.l.b16 %v319
        %v416 = vunpack.c.h.b16 %v319
        %v417 = vunpack.c.l.b16 %v320
        %v418 = vunpack.c.h.b16 %v320
        %v419 = vunpack.c.l.b16 %v321
        %v420 = vunpack.c.h.b16 %v321
        %v421 = vunpack.c.l.b16 %v322
        %v422 = vunpack.c.h.b16 %v322
        %v423 = vunpack.c.l.b16 %v323
        %v424 = vunpack.c.h.b16 %v323
        %v425 = vunpack.c.l.b16 %v324
        %v426 = vunpack.c.h.b16 %v324
        %v427 = vunpack.c.l.b16 %v325
        %v428 = vunpack.c.h.b16 %v325
        %v429 = vunpack.c.l.b16 %v326
        %v430 = vunpack.c.h.b16 %v326
        %v431 = vunpack.c.l.b16 %v327
        %v432 = vunpack.c.h.b16 %v327
        %v433 = vunpack.c.l.b16 %v328
        %v434 = vunpack.c.h.b16 %v328
        %v435 = vunpack.c.l.b16 %v329
        %v436 = vunpack.c.h.b16 %v329
        %v437 = vunpack.c.l.b16 %v330
        %v438 = vunpack.c.h.b16 %v330
        %v439 = vunpack.c.l.b16 %v331
        %v440 = vunpack.c.h.b16 %v331
        %v441 = vunpack.c.l.b16 %v332
        %v442 = vunpack.c.h.b16 %v332
        %v443 = vunpack.c.l.b16 %v333
        %v444 = vunpack.c.h.b16 %v333
        %v445 = vunpack.c.l.b16 %v334
        %v446 = vunpack.c.h.b16 %v334
        %v447 = vunpack.c.l.b16 %v335
        %v448 = vunpack.c.h.b16 %v335
        %v449 = vpack.c.b16 %v387, %v385
        %v450 = vpack.c.b16 %v388, %v386
        %v451 = vpack.c.b16 %v391, %v389
        %v452 = vpack.c.b16 %v392, %v390
        %v453 = vpack.c.b16 %v395, %v393
        %v454 = vpack.c.b16 %v396, %v394
        %v455 = vpack.c.b16 %v399, %v397
        %v456 = vpack.c.b16 %v400, %v398
        %v457 = vpack.c.b16 %v403, %v401
        %v458 = vpack.c.b16 %v404, %v402
        %v459 = vpack.c.b16 %v407, %v405
        %v460 = vpack.c.b16 %v408, %v406
        %v461 = vpack.c.b16 %v411, %v409
        %v462 = vpack.c.b16 %v412, %v410
        %v463 = vpack.c.b16 %v415, %v413
        %v464 = vpack.c.b16 %v416, %v414
        %v465 = vpack.c.b16 %v419, %v417
        %v466 = vpack.c.b16 %v420, %v418
        %v467 = vpack.c.b16 %v423, %v421
        %v468 = vpack.c.b16 %v424, %v422
        %v469 = vpack.c.b16 %v427, %v425
        %v470 = vpack.c.b16 %v428, %v426
        %v471 = vpack.c.b16 %v431, %v429
        %v472 = vpack.c.b16 %v432, %v430
        %v473 = vpack.c.b16 %v435, %v433
        %v474 = vpack.c.b16 %v436, %v434
        %v475 = vpack.c.b16 %v439, %v437
        %v476 = vpack.c.b16 %v440, %v438
        %v477 = vpack.c.b16 %v443, %v441
        %v478 = vpack.c.b16 %v444, %v442
        %v479 = vpack.c.b16 %v447, %v445
        %v480 = vpack.c.b16 %v448, %v446
        %513 = vmatprep.subr.bf16.mxu0 %v464
        %514 = vmatpush1.bf16.xpose.msra.mxu0 %v463
        %515 = vmatprep.subr.bf16.mxu0 %v462
        %516 = vmatpush1.bf16.xpose.msra.mxu0 %v461
        %517 = vmatprep.subr.bf16.mxu0 %v460
        %518 = vmatpush1.bf16.xpose.msra.mxu0 %v459
        %519 = vmatprep.subr.bf16.mxu0 %v458
        %520 = vmatpush1.bf16.xpose.msra.mxu0 %v457
        %521 = vmatprep.subr.bf16.mxu0 %v456
        %522 = vmatpush1.bf16.xpose.msra.mxu0 %v455
        %523 = vmatprep.subr.bf16.mxu0 %v454
        %524 = vmatpush1.bf16.xpose.msra.mxu0 %v453
        %525 = vmatprep.subr.bf16.mxu0 %v452
        %526 = vmatpush1.bf16.xpose.msra.mxu0 %v451
        %527 = vmatprep.subr.bf16.mxu0 %v450
        %528 = vmatpush1.bf16.xpose.msra.mxu0 %v449
        %529 = vmatprep.subr.bf16.mxu0 %v480
        %530 = vmatpush2.bf16.xpose.msra.mxu0 %v479
        %531 = vmatprep.subr.bf16.mxu0 %v478
        %532 = vmatpush2.bf16.xpose.msra.mxu0 %v477
        %533 = vmatprep.subr.bf16.mxu0 %v476
        %534 = vmatpush2.bf16.xpose.msra.mxu0 %v475
        %535 = vmatprep.subr.bf16.mxu0 %v474
        %536 = vmatpush2.bf16.xpose.msra.mxu0 %v473
        %537 = vmatprep.subr.bf16.mxu0 %v472
        %538 = vmatpush2.bf16.xpose.msra.mxu0 %v471
        %539 = vmatprep.subr.bf16.mxu0 %v470
        %540 = vmatpush2.bf16.xpose.msra.mxu0 %v469
        %541 = vmatprep.subr.bf16.mxu0 %v468
        %542 = vmatpush2.bf16.xpose.msra.mxu0 %v467
        %543 = vmatprep.subr.bf16.mxu0 %v466
        %544 = vmatpush2.bf16.xpose.msra.mxu0 %v465
        %545 = vmatprep.mubr.bf16.mxu0 %v346
        %546 = vmatmul.mubr.bf16.gmra.mxu0 %v345
        %v547 = vpop.f32.mrf.mxu0
        %v548 = vadd.f32 0.0, %v547
        %v549 = vpop.f32.mrf.mxu0
        %v550 = vadd.f32 0.0, %v549
        %v551 = vpop.f32.mrf.mxu0
        %v552 = vadd.f32 0.0, %v551
        %v553 = vpop.f32.mrf.mxu0
        %v554 = vadd.f32 0.0, %v553
        %555 = vmatprep.mubr.bf16.mxu0 %v348
        %556 = vmatmul.mubr.bf16.gmra.mxu0 %v347
        %v557 = vpop.f32.mrf.mxu0
        %v558 = vadd.f32 0.0, %v557
        %v559 = vpop.f32.mrf.mxu0
        %v560 = vadd.f32 0.0, %v559
        %v561 = vpop.f32.mrf.mxu0
        %v562 = vpop.f32.mrf.mxu0
        %563 = vdwg.mxu0
        %v564 = vadd.f32 %v295, %v548
        %v565 = vadd.f32 %v296, %v550
        %v566 = vadd.f32 %v297, %v552
        %v567 = vadd.f32 %v298, %v554
        %v568 = vadd.f32 %v299, %v558
        %v569 = vadd.f32 %v300, %v560
        %570 = vst [vmem:[#allocation2] sm:$0xff] %v564
        %571 = vst [vmem:[#allocation2 + $0x8] sm:$0xff] %v565
        %572 = vst [vmem:[#allocation2 + $0x10] sm:$0xff] %v566
        %573 = vst [vmem:[#allocation2 + $0x18] sm:$0xff] %v567
        %574 = vst [vmem:[#allocation2 + $0x20] sm:$0xff] %v568
        %575 = vst [vmem:[#allocation2 + $0x28] sm:$0xff] %v569
        // Predicated region
        $region49: #{tpu_custom_call.1} parent=31 // pred_check
          %p576 = pneg %p285
        $region50: #{tpu_custom_call.1} parent=31 // pred_check_branch
          %578 = sbr.rel (%p576) target = $region52
        $region51: #{tpu_custom_call.1} parent=31 // pred_region
          %v579 = vld [vmem:[#allocation2] sm:$0xff]
          %v580 = vld [vmem:[#allocation2 + $0x8] sm:$0xff]
          %v581 = vld [vmem:[#allocation2 + $0x10] sm:$0xff]
          %v582 = vld [vmem:[#allocation2 + $0x18] sm:$0xff]
          %v583 = vld [vmem:[#allocation2 + $0x20] sm:$0xff]
          %v584 = vld [vmem:[#allocation2 + $0x28] sm:$0xff]
          %v585 = vld [vmem:[%s250] sm:$0x3]
          %v587 = vlaneseq
          %v588 = vshrl.u32 %v587, 7
          %v589 = vsub.s32 0, %v588
          %v590 = vrot.slane %v585, %v589
          %v591 = vlaneseq
          %v592 = vshrl.u32 %v591, 7
          %v593 = vsub.s32 1, %v592
          %v594 = vrot.slane %v585, %v593
          %v597 = vadd.f32 %v579, %v590
          %v598 = vadd.f32 %v580, %v594
          %v599 = vadd.f32 %v581, %v590
          %v600 = vadd.f32 %v582, %v594
          %v601 = vadd.f32 %v583, %v590
          %v602 = vadd.f32 %v584, %v594
          %v603 = vpack.c.bf16 %v599, %v597
          %v604 = vpack.c.bf16 %v600, %v598
          %v605 = vpack.c.bf16 %v601, %v601
          %v606 = vpack.c.bf16 %v602, %v602
          %v611 = vunpack.c.l.b16 %v603
          %v612 = vunpack.c.l.b16 %v604
          %v613 = vunpack.c.h.b16 %v603
          %v614 = vunpack.c.h.b16 %v604
          %v615 = vunpack.c.l.b16 %v605
          %v616 = vunpack.c.l.b16 %v606
          %v617 = vpack.c.b16 %v612, %v611
          %v618 = vpack.c.b16 %v614, %v613
          %v619 = vpack.c.b16 %v616, %v615
          %623 = vst [vmem:[%s277] sm:$0xff] %v617
          %624 = vst [vmem:[%s277 + $0x8] sm:$0xff] %v618
          %625 = vst [vmem:[%s277 + $0x10] sm:$0xff] %v619
        $region52: #{tpu_custom_call.1} parent=31 // pred_fallthru
          _
        %s626 = sand.u32 %s132, 1
        %s627 = scalar_lea.sflag [#allocation5], %s626
        %s628 = sand.u32 %s132, 1
        %s629 = smul.addr %s628, 24
        %s630 = scalar_lea.vmem [#allocation9], %s629
        // Predicated region
        $region53: #{tpu_custom_call.1} parent=31 // pred_check
          %p631 = pneg %p142
        $region54: #{tpu_custom_call.1} parent=31 // pred_check_branch
          %633 = sbr.rel (%p631) target = $region56
        $region55: #{tpu_custom_call.1} parent=31 // pred_region
          %s634 = smul.u32 3, %s27
          %s635 = smul.u32 2, %s26
          %s637 = ssub.s32 384, 384
          %638 = vsyncadd %s627, %s637
          %s639 = smul.addr %s634, 6
          %s640 = sadd.s32 %s635, %s639
          %s641 = smul.addr %s640, 64
          %s642 = scalar_lea.hbm %s3, %s641
          %s643 = sshll.u32 %s630, 4
          %s644 = int_to_ptr.vmem [resolvable:$true] %s643
          %649 = dma.vmem_to_hbm [thread:$0]  %s644, 384, %s642, %s627, 128, 384, 8
        $region56: #{tpu_custom_call.1} parent=31 // pred_fallthru
          _
      $region32: #{tpu_custom_call.1} parent=5 // pred_fallthru
        _
      %p650 = scmp.le.s32.totalorder 2, %s16
      // Predicated region
      $region57: #{tpu_custom_call.1} parent=5 // pred_check
        %p651 = pneg %p650
      $region58: #{tpu_custom_call.1} parent=5 // pred_check_branch
        %653 = sbr.rel (%p651) target = $region60
      $region59: #{tpu_custom_call.1} parent=5 // pred_region
        %s654 = ssub.s32 %s16, 2
        // Predicated region
        $region61: #{tpu_custom_call.1} parent=59 // pred_check
          %p655 = pneg %p148
        $region62: #{tpu_custom_call.1} parent=59 // pred_check_branch
          %657 = sbr.rel (%p655) target = $region64
        $region63: #{tpu_custom_call.1} parent=59 // pred_region
          %s658 = sand.u32 %s133, 1
          %s659 = scalar_lea.sflag [#allocation5], %s658
          %s660 = sand.u32 %s133, 1
          %s661 = smul.addr %s660, 24
          %s662 = scalar_lea.vmem [#allocation9], %s661
          %663 = dma.done %s659, 384
        $region64: #{tpu_custom_call.1} parent=59 // pred_fallthru
          _
      $region60: #{tpu_custom_call.1} parent=5 // pred_fallthru
        _
    $region6: #{tpu_custom_call.1} parent=1 // loop_footer
      %s20 = sadd.s32 1, %s16
    $region7: #{tpu_custom_call.1} parent=1 // loop_footer_branch
      %15 = sbr.rel target = $region3
    $region8: #{tpu_custom_call.1} parent=1 // loop_exit
      _
    %664 = vsyncpa [#allocation4], 1
    %s665 = scalar_lea.sflag [#allocation4], 1
    %666 = vsyncpa %s665, 1
    %667 = vsyncpa [#allocation7], 1
    %s668 = scalar_lea.sflag [#allocation7], 1
    %669 = vsyncpa %s668, 1
    %670 = vsyncpa [#allocation5], 1
    %s671 = scalar_lea.sflag [#allocation5], 1
    %672 = vsyncpa %s671, 1

</llo_original>
